<compile_context>
chip_gen: v6e
topology: v6e:2x2x1
jax: 0.10.0
libtpu: 0.0.40
codegen_flags: <defaults>
</compile_context>

<pallas_src>
import jax
import jax.numpy as jnp
from jax.experimental import pallas as pl
from jax.experimental.pallas import tpu as pltpu

_PACK = 8  # batch rows packed per vreg row (sublane -> lane packing factor)


# ---------------------------------------------------------------------------
# Kernel
# ---------------------------------------------------------------------------
def _critic_kernel(x_ref, w1_ref, b1_ref, w2_ref, b2_ref, w3_ref, b3_ref,
                   w4_ref, b4_ref, out_ref):
    prec = jax.lax.Precision.DEFAULT  # bf16 operands -> single-pass MXU

    # Layer 1: packed sa (tr, 8*sa_pad) @ replicated fused W1 (8*sa_pad, 256).
    h = jnp.dot(x_ref[...], w1_ref[...],
                preferred_element_type=jnp.float32, precision=prec) + b1_ref[...]
    h = jnp.maximum(h, 0.0).astype(jnp.bfloat16)

    # Layers 2-3 (replicated block-diagonal fused heads) + ReLU.
    h = jnp.dot(h, w2_ref[...],
                preferred_element_type=jnp.float32, precision=prec) + b2_ref[...]
    h = jnp.maximum(h, 0.0).astype(jnp.bfloat16)
    h = jnp.dot(h, w3_ref[...],
                preferred_element_type=jnp.float32, precision=prec) + b3_ref[...]
    h = jnp.maximum(h, 0.0).astype(jnp.bfloat16)

    # Layer 4: (tr, 256) @ (256, 16) -> per row: [q1_0,q2_0, ..., q1_7,q2_7].
    out_ref[...] = (jnp.dot(h, w4_ref[...],
                            preferred_element_type=jnp.float32, precision=prec)
                    + b4_ref[...]).astype(out_ref.dtype)


# ---------------------------------------------------------------------------
# One-time parameter packing (off the hot path)
# ---------------------------------------------------------------------------
def _round_up(x, m):
    return ((x + m - 1) // m) * m


def _cdiv(a, b):
    return -(-a // b)


def _block_diag2(a, b):
    """Block-diagonal fusion of the Q1 / Q2 heads."""
    top = jnp.concatenate([a, jnp.zeros((a.shape[0], b.shape[1]), a.dtype)], axis=1)
    bot = jnp.concatenate([jnp.zeros((b.shape[0], a.shape[1]), b.dtype), b], axis=1)
    return jnp.concatenate([top, bot], axis=0)


def _replicate_block_diag(w, n):
    """n copies of w down the diagonal: (n*in, n*out)."""
    return jnp.kron(jnp.eye(n, dtype=w.dtype), w)


def pack_critic_params(params, state_dim, action_dim):
    """Transpose to (in,out), fuse Q1/Q2 heads block-diagonally, pad the sa
    feature axis, replicate 8x block-diagonally for lane-packed batches, and
    cast weights to bf16.  Call once; reuse every forward."""
    P = _PACK
    sa_dim = state_dim + action_dim
    sa_pad = _round_up(sa_dim, 16)  # 8 * sa_pad is a multiple of 128 lanes

    def wT(name):
        W, _ = params[name]
        return jnp.asarray(W, jnp.float32).T  # (in, out)

    def bias(name):
        _, b = params[name]
        return jnp.asarray(b, jnp.float32)

    # Fuse the two heads (columns [0:16] = Q1, [16:32] = Q2, etc.).
    w1 = jnp.concatenate([wT("l1"), wT("l5")], axis=1)       # (sa, 32)
    w1 = jnp.pad(w1, ((0, sa_pad - sa_dim), (0, 0)))         # zero rows = sa pad
    b1 = jnp.concatenate([bias("l1"), bias("l5")])           # (32,)
    w2 = _block_diag2(wT("l2"), wT("l6"))                    # (32, 64)
    b2 = jnp.concatenate([bias("l2"), bias("l6")])           # (64,)
    w3 = _block_diag2(wT("l3"), wT("l7"))                    # (64, 32)
    b3 = jnp.concatenate([bias("l3"), bias("l7")])           # (32,)
    w4 = _block_diag2(wT("l4"), wT("l8"))                    # (32, 2)
    b4 = jnp.concatenate([bias("l4"), bias("l8")])           # (2,)

    def rep_w(w):   # replicate for 8 lane-packed batch rows, cast to bf16
        return _replicate_block_diag(w, P).astype(jnp.bfloat16)

    def rep_b(b):   # biases stay f32 (added to the f32 accumulator)
        return jnp.tile(b, (P,))[None, :].astype(jnp.float32)

    return dict(
        w1=rep_w(w1), b1=rep_b(b1),   # (P*sa_pad, P*32), (1, P*32)
        w2=rep_w(w2), b2=rep_b(b2),   # (P*32,     P*64)
        w3=rep_w(w3), b3=rep_b(b3),   # (P*64,     P*32)
        w4=rep_w(w4), b4=rep_b(b4),   # (P*32,     P*2)
        sa_dim=sa_dim, sa_pad=sa_pad, pack=P,
    )


# ---------------------------------------------------------------------------
# Host wrapper
# ---------------------------------------------------------------------------
def _choose_tile(rows, cap):
    """Packed-row tile (multiple of 8 sublanes) and padded row count."""
    tr = min(cap, _round_up(rows, 8))
    tr = max(8, _round_up(tr, 8))
    rows_p = _round_up(rows, tr)
    # With plenty of work, keep >= 2 tiles so the "parallel" batch axis can
    # shard across both TensorCores on v7x (harmless elsewhere).
    if rows_p // tr == 1 and rows >= 256:
        tr = _round_up(_cdiv(rows, 2), 8)
        rows_p = _round_up(rows, tr)
    return tr, rows_p


def critic_forward(state, action, packed, *, tile_rows=4096):
    """Pallas implementation of Critic.forward -> (q1, q2).

    `packed` comes from pack_critic_params(). `tile_rows` is the packed-row
    tile (each packed row carries 8 batch rows)."""
    P = packed["pack"]
    sa_dim, sa_pad = packed["sa_dim"], packed["sa_pad"]
    B = state.shape[0]
    assert state.shape[1] + action.shape[1] == sa_dim

    rows = _cdiv(B, P)
    tr, rows_p = _choose_tile(rows, tile_rows)
    Bp = rows_p * P

    # Concat + bf16 cast + batch/feature zero-pad + lane-pack reshape. All of
    # this fuses into the single pass materializing the packed sa array; there
    # is no extra full-copy pad of the raw state/action inputs.
    sa = jnp.concatenate(
        [state.astype(jnp.bfloat16), action.astype(jnp.bfloat16)], axis=1)
    sa = jnp.pad(sa, ((0, Bp - B), (0, sa_pad - sa_dim)))
    x = sa.reshape(rows_p, P * sa_pad)

    w1, b1 = packed["w1"], packed["b1"]
    w2, b2 = packed["w2"], packed["b2"]
    w3, b3 = packed["w3"], packed["b3"]
    w4, b4 = packed["w4"], packed["b4"]

    def resident(arr):
        # Constant index_map -> fetched once, stays VMEM-resident across steps.
        return pl.BlockSpec(arr.shape, lambda i: (0, 0))

    out_w = P * 2  # (q1, q2) of 8 batch rows interleaved per packed row

    # Scoped-VMEM budget from the real padded tile footprint (double-buffered
    # in/out tiles + resident weights), clamped to a generation-safe range.
    in_row_b = P * sa_pad * 2                  # bf16 input row
    out_row_b = _round_up(out_w, 128) * 4      # f32 output row (lane padded)
    w_bytes = sum(int(packed[k].size) * packed[k].dtype.itemsize
                  for k in ("w1", "b1", "w2", "b2", "w3", "b3", "w4", "b4"))
    vmem_limit = 2 * tr * (in_row_b + out_row_b) + 2 * w_bytes + (8 << 20)
    vmem_limit = int(min(max(vmem_limit, 16 << 20), 40 << 20))

    out = pl.pallas_call(
        _critic_kernel,
        out_shape=jax.ShapeDtypeStruct((rows_p, out_w), jnp.float32),
        grid=(rows_p // tr,),
        in_specs=[
            pl.BlockSpec((tr, P * sa_pad), lambda i: (i, 0)),  # lane-packed sa
            resident(w1), resident(b1),
            resident(w2), resident(b2),
            resident(w3), resident(b3),
            resident(w4), resident(b4),
        ],
        out_specs=pl.BlockSpec((tr, out_w), lambda i: (i, 0)),
        compiler_params=pltpu.CompilerParams(
            dimension_semantics=("parallel",),
            vmem_limit_bytes=vmem_limit),
    )(x, w1, b1, w2, b2, w3, b3, w4, b4)

    # Un-interleave: (rows_p, 16) -> (rows_p*8, 2); col 0 = q1, col 1 = q2.
    q = out.reshape(rows_p * P, 2)[:B]
    return q[:, 0:1], q[:, 1:2]


# ---------------------------------------------------------------------------
# Param init (matches nn.Linear shapes in Critic.__init__) + pure-JAX reference
# ---------------------------------------------------------------------------
def init_critic_params(state_dim, action_dim, key):
    sizes = {
        "l1": (16, state_dim + action_dim),
        "l2": (32, 16),
        "l3": (16, 32),
        "l4": (1, 16),
        "l5": (16, state_dim + action_dim),
        "l6": (32, 16),
        "l7": (16, 32),
        "l8": (1, 16),
    }
    params = {}
    for name, (out_f, in_f) in sizes.items():
        key, kw, kb = jax.random.split(key, 3)
        bound = 1.0 / jnp.sqrt(in_f)  # PyTorch default uniform bound
        W = jax.random.uniform(kw, (out_f, in_f), jnp.float32, -bound, bound)
        b = jax.random.uniform(kb, (out_f,), jnp.float32, -bound, bound)
        params[name] = (W, b)
    return params


def _reference_forward(state, action, params):
    sa = jnp.concatenate([state, action], axis=1)

    def lin(x, name):
        W, b = params[name]
        return x @ W.T + b

    q1 = jax.nn.relu(lin(sa, "l1"))
    q1 = jax.nn.relu(lin(q1, "l2"))
    q1 = jax.nn.relu(lin(q1, "l3"))
    q1 = lin(q1, "l4")
    q2 = jax.nn.relu(lin(sa, "l5"))
    q2 = jax.nn.relu(lin(q2, "l6"))
    q2 = jax.nn.relu(lin(q2, "l7"))
    q2 = lin(q2, "l8")
    return q1, q2


if __name__ == "__main__":
    key = jax.random.PRNGKey(0)
    state_dim, action_dim = 12, 4

    k_in, k_par = jax.random.split(key)
    params = init_critic_params(state_dim, action_dim, k_par)
    packed = pack_critic_params(params, state_dim, action_dim)  # one-time

    # (batch, packed-row tile): first exercises the single-tile path, second
    # exercises the multi-tile grid + batch-padding path.
    for batch, tile in ((20, 4096), (300, 16)):
        ks, ka = jax.random.split(jax.random.fold_in(k_in, batch))
        state = jax.random.normal(ks, (batch, state_dim), jnp.float32)
        action = jax.random.normal(ka, (batch, action_dim), jnp.float32)

        q1, q2 = critic_forward(state, action, packed, tile_rows=tile)
        jax.block_until_ready((q1, q2))

        r1, r2 = _reference_forward(state, action, params)
        assert q1.shape == (batch, 1) and q2.shape == (batch, 1)
        # bf16 activations/weights (f32 accumulation) vs. the f32 reference:
        # compare at bf16-scale tolerance.
        assert jnp.allclose(q1, r1, atol=5e-2, rtol=5e-2), "q1 mismatch vs reference"
        assert jnp.allclose(q2, r2, atol=5e-2, rtol=5e-2), "q2 mismatch vs reference"

    print("KERNEL_OK")
</pallas_src>

<mosaic_0001>
module attributes {stable_mosaic.version = 11 : i64} {
  func.func @_critic_kernel(%arg0: i32, %arg1: memref<8x128xbf16, #tpu.memory_space<vmem>>, %arg2: memref<128x256xbf16, #tpu.memory_space<vmem>>, %arg3: memref<1x256xf32, #tpu.memory_space<vmem>>, %arg4: memref<256x512xbf16, #tpu.memory_space<vmem>>, %arg5: memref<1x512xf32, #tpu.memory_space<vmem>>, %arg6: memref<512x256xbf16, #tpu.memory_space<vmem>>, %arg7: memref<1x256xf32, #tpu.memory_space<vmem>>, %arg8: memref<256x16xbf16, #tpu.memory_space<vmem>>, %arg9: memref<1x16xf32, #tpu.memory_space<vmem>>, %arg10: memref<8x16xf32, #tpu.memory_space<vmem>>) attributes {dimension_semantics = [#tpu.dimension_semantics<parallel>], iteration_bounds = array<i64: 1>, scalar_prefetch = 0 : i64, scratch_operands = 0 : i64, tpu.core_type = #tpu.core_type<tc>, window_params = [{transform_indices = @transform_0, window_bounds = array<i64: 8, 128>}, {pipeline_mode = #tpu.pipeline_mode<synchronous>, transform_indices = @transform_1, window_bounds = array<i64: 128, 256>}, {pipeline_mode = #tpu.pipeline_mode<synchronous>, transform_indices = @transform_2, window_bounds = array<i64: 1, 256>}, {pipeline_mode = #tpu.pipeline_mode<synchronous>, transform_indices = @transform_3, window_bounds = array<i64: 256, 512>}, {pipeline_mode = #tpu.pipeline_mode<synchronous>, transform_indices = @transform_4, window_bounds = array<i64: 1, 512>}, {pipeline_mode = #tpu.pipeline_mode<synchronous>, transform_indices = @transform_5, window_bounds = array<i64: 512, 256>}, {pipeline_mode = #tpu.pipeline_mode<synchronous>, transform_indices = @transform_6, window_bounds = array<i64: 1, 256>}, {pipeline_mode = #tpu.pipeline_mode<synchronous>, transform_indices = @transform_7, window_bounds = array<i64: 256, 16>}, {pipeline_mode = #tpu.pipeline_mode<synchronous>, transform_indices = @transform_8, window_bounds = array<i64: 1, 16>}, {transform_indices = @transform_9, window_bounds = array<i64: 8, 16>}]} {
    %c0 = arith.constant 0 : index
    %c0_0 = arith.constant 0 : index
    %0 = vector.load %arg1[%c0, %c0_0] : memref<8x128xbf16, #tpu.memory_space<vmem>>, vector<8x128xbf16>
    %c0_1 = arith.constant 0 : index
    %c0_2 = arith.constant 0 : index
    %1 = vector.load %arg2[%c0_1, %c0_2] : memref<128x256xbf16, #tpu.memory_space<vmem>>, vector<128x256xbf16>
    %cst = arith.constant dense<0.000000e+00> : vector<8x256xf32>
    %2 = tpu.matmul %0, %1, %cst {dimension_numbers = #tpu.dot_dimension_numbers<[1], [0], [0], [1], [0, 0, 1, 1], [], []>} : vector<8x128xbf16>, vector<128x256xbf16>, vector<8x256xf32> -> vector<8x256xf32>
    %c0_3 = arith.constant 0 : index
    %c0_4 = arith.constant 0 : index
    %3 = vector.load %arg3[%c0_3, %c0_4] : memref<1x256xf32, #tpu.memory_space<vmem>>, vector<1x256xf32>
    %4 = vector.broadcast %3 : vector<1x256xf32> to vector<8x256xf32>
    %5 = arith.addf %2, %4 : vector<8x256xf32>
    %cst_5 = arith.constant 0.000000e+00 : f32
    %6 = vector.broadcast %cst_5 : f32 to vector<8x256xf32>
    %7 = arith.maximumf %5, %6 : vector<8x256xf32>
    %8 = arith.truncf %7 : vector<8x256xf32> to vector<8x256xbf16>
    %c0_6 = arith.constant 0 : index
    %c0_7 = arith.constant 0 : index
    %9 = vector.load %arg4[%c0_6, %c0_7] : memref<256x512xbf16, #tpu.memory_space<vmem>>, vector<256x512xbf16>
    %cst_8 = arith.constant dense<0.000000e+00> : vector<8x512xf32>
    %10 = tpu.matmul %8, %9, %cst_8 {dimension_numbers = #tpu.dot_dimension_numbers<[1], [0], [0], [1], [0, 0, 1, 1], [], []>} : vector<8x256xbf16>, vector<256x512xbf16>, vector<8x512xf32> -> vector<8x512xf32>
    %c0_9 = arith.constant 0 : index
    %c0_10 = arith.constant 0 : index
    %11 = vector.load %arg5[%c0_9, %c0_10] : memref<1x512xf32, #tpu.memory_space<vmem>>, vector<1x512xf32>
    %12 = vector.broadcast %11 : vector<1x512xf32> to vector<8x512xf32>
    %13 = arith.addf %10, %12 : vector<8x512xf32>
    %cst_11 = arith.constant 0.000000e+00 : f32
    %14 = vector.broadcast %cst_11 : f32 to vector<8x512xf32>
    %15 = arith.maximumf %13, %14 : vector<8x512xf32>
    %16 = arith.truncf %15 : vector<8x512xf32> to vector<8x512xbf16>
    %c0_12 = arith.constant 0 : index
    %c0_13 = arith.constant 0 : index
    %17 = vector.load %arg6[%c0_12, %c0_13] : memref<512x256xbf16, #tpu.memory_space<vmem>>, vector<512x256xbf16>
    %cst_14 = arith.constant dense<0.000000e+00> : vector<8x256xf32>
    %18 = tpu.matmul %16, %17, %cst_14 {dimension_numbers = #tpu.dot_dimension_numbers<[1], [0], [0], [1], [0, 0, 1, 1], [], []>} : vector<8x512xbf16>, vector<512x256xbf16>, vector<8x256xf32> -> vector<8x256xf32>
    %c0_15 = arith.constant 0 : index
    %c0_16 = arith.constant 0 : index
    %19 = vector.load %arg7[%c0_15, %c0_16] : memref<1x256xf32, #tpu.memory_space<vmem>>, vector<1x256xf32>
    %20 = vector.broadcast %19 : vector<1x256xf32> to vector<8x256xf32>
    %21 = arith.addf %18, %20 : vector<8x256xf32>
    %cst_17 = arith.constant 0.000000e+00 : f32
    %22 = vector.broadcast %cst_17 : f32 to vector<8x256xf32>
    %23 = arith.maximumf %21, %22 : vector<8x256xf32>
    %24 = arith.truncf %23 : vector<8x256xf32> to vector<8x256xbf16>
    %c0_18 = arith.constant 0 : index
    %c0_19 = arith.constant 0 : index
    %25 = vector.load %arg8[%c0_18, %c0_19] : memref<256x16xbf16, #tpu.memory_space<vmem>>, vector<256x16xbf16>
    %cst_20 = arith.constant dense<0.000000e+00> : vector<8x16xf32>
    %26 = tpu.matmul %24, %25, %cst_20 {dimension_numbers = #tpu.dot_dimension_numbers<[1], [0], [0], [1], [0, 0, 1, 1], [], []>} : vector<8x256xbf16>, vector<256x16xbf16>, vector<8x16xf32> -> vector<8x16xf32>
    %c0_21 = arith.constant 0 : index
    %c0_22 = arith.constant 0 : index
    %27 = vector.load %arg9[%c0_21, %c0_22] : memref<1x16xf32, #tpu.memory_space<vmem>>, vector<1x16xf32>
    %28 = vector.broadcast %27 : vector<1x16xf32> to vector<8x16xf32>
    %29 = arith.addf %26, %28 : vector<8x16xf32>
    %c0_23 = arith.constant 0 : index
    %c0_24 = arith.constant 0 : index
    %30 = vector.load %arg10[%c0_23, %c0_24] : memref<8x16xf32, #tpu.memory_space<vmem>>, vector<8x16xf32>
    tpu.vector_store %arg10[%c0_23, %c0_24], %29 {strides = array<i32>} : memref<8x16xf32, #tpu.memory_space<vmem>>, vector<8x16xf32>,
    return
  }
  func.func @transform_0(%arg0: i32) -> (i32, i32) {
    %c0_i32 = arith.constant 0 : i32
    %c0_i32_0 = arith.constant 0 : i32
    return %arg0, %c0_i32 : i32, i32
  }
  func.func @transform_1(%arg0: i32) -> (i32, i32) {
    %c0_i32 = arith.constant 0 : i32
    %c0_i32_0 = arith.constant 0 : i32
    %c0_i32_1 = arith.constant 0 : i32
    return %c0_i32, %c0_i32_0 : i32, i32
  }
  func.func @transform_2(%arg0: i32) -> (i32, i32) {
    %c0_i32 = arith.constant 0 : i32
    %c0_i32_0 = arith.constant 0 : i32
    %c0_i32_1 = arith.constant 0 : i32
    return %c0_i32, %c0_i32_0 : i32, i32
  }
  func.func @transform_3(%arg0: i32) -> (i32, i32) {
    %c0_i32 = arith.constant 0 : i32
    %c0_i32_0 = arith.constant 0 : i32
    %c0_i32_1 = arith.constant 0 : i32
    return %c0_i32, %c0_i32_0 : i32, i32
  }
  func.func @transform_4(%arg0: i32) -> (i32, i32) {
    %c0_i32 = arith.constant 0 : i32
    %c0_i32_0 = arith.constant 0 : i32
    %c0_i32_1 = arith.constant 0 : i32
    return %c0_i32, %c0_i32_0 : i32, i32
  }
  func.func @transform_5(%arg0: i32) -> (i32, i32) {
    %c0_i32 = arith.constant 0 : i32
    %c0_i32_0 = arith.constant 0 : i32
    %c0_i32_1 = arith.constant 0 : i32
    return %c0_i32, %c0_i32_0 : i32, i32
  }
  func.func @transform_6(%arg0: i32) -> (i32, i32) {
    %c0_i32 = arith.constant 0 : i32
    %c0_i32_0 = arith.constant 0 : i32
    %c0_i32_1 = arith.constant 0 : i32
    return %c0_i32, %c0_i32_0 : i32, i32
  }
  func.func @transform_7(%arg0: i32) -> (i32, i32) {
    %c0_i32 = arith.constant 0 : i32
    %c0_i32_0 = arith.constant 0 : i32
    %c0_i32_1 = arith.constant 0 : i32
    return %c0_i32, %c0_i32_0 : i32, i32
  }
  func.func @transform_8(%arg0: i32) -> (i32, i32) {
    %c0_i32 = arith.constant 0 : i32
    %c0_i32_0 = arith.constant 0 : i32
    %c0_i32_1 = arith.constant 0 : i32
    return %c0_i32, %c0_i32_0 : i32, i32
  }
  func.func @transform_9(%arg0: i32) -> (i32, i32) {
    %c0_i32 = arith.constant 0 : i32
    %c0_i32_0 = arith.constant 0 : i32
    return %arg0, %c0_i32 : i32, i32
  }
}

</mosaic_0001>

<llo_original>
// kernel: tpu_custom_call.1
$region0: #{tpu_custom_call.1}
  #allocation0 [shape = 'u32[]', space=smem, size = 0x4, offset = 0x4, fixed_abs, tag = 'smem constant byte address 0x4 - core index']
  #allocation1 [shape = 'u32[144,128]{1,0:T(1,128)}', space=vmem, size = 0x12000, scoped, tag = 'internal scratch']
  %s0 = inlined_call_operand.vmem [shape: bf16[8,128], index: 0, kind: input, shape index: {}]
  %s1 = inlined_call_operand.vmem [shape: bf16[128,256], index: 1, kind: input, shape index: {}]
  %s2 = inlined_call_operand.vmem [shape: f32[1,256], index: 2, kind: input, shape index: {}]
  %s3 = inlined_call_operand.hbm [shape: bf16[256,512], index: 3, kind: input, shape index: {}]
  %s4 = inlined_call_operand.vmem [shape: f32[1,512], index: 4, kind: input, shape index: {}]
  %s5 = inlined_call_operand.hbm [shape: bf16[512,256], index: 5, kind: input, shape index: {}]
  %s6 = inlined_call_operand.vmem [shape: f32[1,256], index: 6, kind: input, shape index: {}]
  %s7 = inlined_call_operand.vmem [shape: bf16[256,16], index: 7, kind: input, shape index: {}]
  %s8 = inlined_call_operand.vmem [shape: f32[1,16], index: 8, kind: input, shape index: {}]
  %s9 = inlined_call_operand.hbm [shape: f32[8,16], index: 9, kind: output, shape index: {}]
  %s10 = sld [smem:[#allocation0]]
  $region54: #{tpu_custom_call.1} parent=0
    _
  %s12 = ssub.s32 1, %s10
  %s13 = scalar_select 0, %s12, %s10
  $region1: #{tpu_custom_call.1} parent=0
    #allocation2 [shape = 'u8[262144]{0}', space=vmem, size = 0x40000, scoped, tag = 'input window, operand 3, single buffered']
    #allocation3 [shape = 's32[1]{0}', space=sflag, size = 0x4, scoped, tag = 'scoped memory for tpu_custom_call.1']
    #allocation4 [shape = 's32[1]{0}', space=sflag, size = 0x4, scoped, tag = 'scoped memory for tpu_custom_call.1']
    #allocation5 [shape = 'u8[262144]{0}', space=vmem, size = 0x40000, scoped, tag = 'input window, operand 5, single buffered']
    #allocation6 [shape = 's32[1]{0}', space=sflag, size = 0x4, scoped, tag = 'scoped memory for tpu_custom_call.1']
    #allocation7 [shape = 'u8[4096]{0}', space=vmem, size = 0x1000, scoped, tag = 'output window, operand 0, single buffered']
    %14 = vsyncpa [#allocation3], 0
    %15 = vsyncpa [#allocation6], 0
    %16 = vsyncpa [#allocation4], 0
    // Predicated region
    $region2: #{tpu_custom_call.1} parent=1 // pred_check
      _
    $region3: #{tpu_custom_call.1} parent=1 // pred_check_branch
      %18 = sbr.rel (0) target = $region5
    $region4: #{tpu_custom_call.1} parent=1 // pred_region
      _
    $region5: #{tpu_custom_call.1} parent=1 // pred_fallthru
      _
    // Predicated region
    $region6: #{tpu_custom_call.1} parent=1 // pred_check
      _
    $region7: #{tpu_custom_call.1} parent=1 // pred_check_branch
      %20 = sbr.rel (0) target = $region9
    $region8: #{tpu_custom_call.1} parent=1 // pred_region
      _
    $region9: #{tpu_custom_call.1} parent=1 // pred_fallthru
      _
    // Predicated region
    $region10: #{tpu_custom_call.1} parent=1 // pred_check
      _
    $region11: #{tpu_custom_call.1} parent=1 // pred_check_branch
      %22 = sbr.rel (0) target = $region13
    $region12: #{tpu_custom_call.1} parent=1 // pred_region
      _
    $region13: #{tpu_custom_call.1} parent=1 // pred_fallthru
      _
    // Predicated region
    $region14: #{tpu_custom_call.1} parent=1 // pred_check
      _
    $region15: #{tpu_custom_call.1} parent=1 // pred_check_branch
      %24 = sbr.rel (0) target = $region17
    $region16: #{tpu_custom_call.1} parent=1 // pred_region
      %s26 = ssub.s32 8192, 8192
      %27 = vsyncadd [#allocation3], %s26
      %s28 = sshll.u32 [#allocation2], 4
      %s29 = int_to_ptr.vmem [resolvable:$true] %s28
      %34 = dma.hbm_to_vmem [thread:$0]  %s3, 8192, %s29, [#allocation3], 256, 256, 16
    $region17: #{tpu_custom_call.1} parent=1 // pred_fallthru
      _
    // Predicated region
    $region18: #{tpu_custom_call.1} parent=1 // pred_check
      _
    $region19: #{tpu_custom_call.1} parent=1 // pred_check_branch
      %36 = sbr.rel (0) target = $region21
    $region20: #{tpu_custom_call.1} parent=1 // pred_region
      _
    $region21: #{tpu_custom_call.1} parent=1 // pred_fallthru
      _
    // Predicated region
    $region22: #{tpu_custom_call.1} parent=1 // pred_check
      _
    $region23: #{tpu_custom_call.1} parent=1 // pred_check_branch
      %38 = sbr.rel (0) target = $region25
    $region24: #{tpu_custom_call.1} parent=1 // pred_region
      %s40 = ssub.s32 8192, 8192
      %41 = vsyncadd [#allocation6], %s40
      %s42 = sshll.u32 [#allocation5], 4
      %s43 = int_to_ptr.vmem [resolvable:$true] %s42
      %48 = dma.hbm_to_vmem [thread:$0]  %s5, 8192, %s43, [#allocation6], 128, 128, 8
    $region25: #{tpu_custom_call.1} parent=1 // pred_fallthru
      _
    // Predicated region
    $region26: #{tpu_custom_call.1} parent=1 // pred_check
      _
    $region27: #{tpu_custom_call.1} parent=1 // pred_check_branch
      %50 = sbr.rel (0) target = $region29
    $region28: #{tpu_custom_call.1} parent=1 // pred_region
      _
    $region29: #{tpu_custom_call.1} parent=1 // pred_fallthru
      _
    // Predicated region
    $region30: #{tpu_custom_call.1} parent=1 // pred_check
      _
    $region31: #{tpu_custom_call.1} parent=1 // pred_check_branch
      %52 = sbr.rel (0) target = $region33
    $region32: #{tpu_custom_call.1} parent=1 // pred_region
      _
    $region33: #{tpu_custom_call.1} parent=1 // pred_fallthru
      _
    // Predicated region
    $region34: #{tpu_custom_call.1} parent=1 // pred_check
      _
    $region35: #{tpu_custom_call.1} parent=1 // pred_check_branch
      %54 = sbr.rel (0) target = $region37
    $region36: #{tpu_custom_call.1} parent=1 // pred_region
      _
    $region37: #{tpu_custom_call.1} parent=1 // pred_fallthru
      _
    // Predicated region
    $region38: #{tpu_custom_call.1} parent=1 // pred_check
      _
    $region39: #{tpu_custom_call.1} parent=1 // pred_check_branch
      %56 = sbr.rel (0) target = $region41
    $region40: #{tpu_custom_call.1} parent=1 // pred_region
      %57 = dma.done [#allocation3], 8192
    $region41: #{tpu_custom_call.1} parent=1 // pred_fallthru
      _
    // Predicated region
    $region42: #{tpu_custom_call.1} parent=1 // pred_check
      _
    $region43: #{tpu_custom_call.1} parent=1 // pred_check_branch
      %59 = sbr.rel (0) target = $region45
    $region44: #{tpu_custom_call.1} parent=1 // pred_region
      %60 = dma.done [#allocation6], 8192
    $region45: #{tpu_custom_call.1} parent=1 // pred_fallthru
      _
    %v62 = vld [vmem:[%s0] sm:$0xf]
    %v63 = vld [vmem:[%s1] sm:$0xff]
    %v64 = vld [vmem:[%s1 + $0x8] sm:$0xff]
    %v65 = vld [vmem:[%s1 + $0x10] sm:$0xff]
    %v66 = vld [vmem:[%s1 + $0x18] sm:$0xff]
    %v67 = vld [vmem:[%s1 + $0x20] sm:$0xff]
    %v68 = vld [vmem:[%s1 + $0x28] sm:$0xff]
    %v69 = vld [vmem:[%s1 + $0x30] sm:$0xff]
    %v70 = vld [vmem:[%s1 + $0x38] sm:$0xff]
    %v71 = vld [vmem:[%s1 + $0x40] sm:$0xff]
    %v72 = vld [vmem:[%s1 + $0x48] sm:$0xff]
    %v73 = vld [vmem:[%s1 + $0x50] sm:$0xff]
    %v74 = vld [vmem:[%s1 + $0x58] sm:$0xff]
    %v75 = vld [vmem:[%s1 + $0x60] sm:$0xff]
    %v76 = vld [vmem:[%s1 + $0x68] sm:$0xff]
    %v77 = vld [vmem:[%s1 + $0x70] sm:$0xff]
    %v78 = vld [vmem:[%s1 + $0x78] sm:$0xff]
    %v79 = vld [vmem:[%s2] sm:$0x3]
    %v81 = vlaneseq
    %v82 = vshrl.u32 %v81, 7
    %v83 = vsub.s32 0, %v82
    %v84 = vrot.slane %v79, %v83
    %v85 = vlaneseq
    %v86 = vshrl.u32 %v85, 7
    %v87 = vsub.s32 1, %v86
    %v88 = vrot.slane %v79, %v87
    %v107 = vunpack.c.l.b16 %v63
    %v108 = vunpack.c.h.b16 %v63
    %v109 = vunpack.c.l.b16 %v64
    %v110 = vunpack.c.h.b16 %v64
    %v111 = vunpack.c.l.b16 %v65
    %v112 = vunpack.c.h.b16 %v65
    %v113 = vunpack.c.l.b16 %v66
    %v114 = vunpack.c.h.b16 %v66
    %v115 = vunpack.c.l.b16 %v67
    %v116 = vunpack.c.h.b16 %v67
    %v117 = vunpack.c.l.b16 %v68
    %v118 = vunpack.c.h.b16 %v68
    %v119 = vunpack.c.l.b16 %v69
    %v120 = vunpack.c.h.b16 %v69
    %v121 = vunpack.c.l.b16 %v70
    %v122 = vunpack.c.h.b16 %v70
    %v123 = vunpack.c.l.b16 %v71
    %v124 = vunpack.c.h.b16 %v71
    %v125 = vunpack.c.l.b16 %v72
    %v126 = vunpack.c.h.b16 %v72
    %v127 = vunpack.c.l.b16 %v73
    %v128 = vunpack.c.h.b16 %v73
    %v129 = vunpack.c.l.b16 %v74
    %v130 = vunpack.c.h.b16 %v74
    %v131 = vunpack.c.l.b16 %v75
    %v132 = vunpack.c.h.b16 %v75
    %v133 = vunpack.c.l.b16 %v76
    %v134 = vunpack.c.h.b16 %v76
    %v135 = vunpack.c.l.b16 %v77
    %v136 = vunpack.c.h.b16 %v77
    %v137 = vunpack.c.l.b16 %v78
    %v138 = vunpack.c.h.b16 %v78
    %v139 = vpack.c.b16 %v109, %v107
    %v140 = vpack.c.b16 %v110, %v108
    %v141 = vpack.c.b16 %v113, %v111
    %v142 = vpack.c.b16 %v114, %v112
    %v143 = vpack.c.b16 %v117, %v115
    %v144 = vpack.c.b16 %v118, %v116
    %v145 = vpack.c.b16 %v121, %v119
    %v146 = vpack.c.b16 %v122, %v120
    %v147 = vpack.c.b16 %v125, %v123
    %v148 = vpack.c.b16 %v126, %v124
    %v149 = vpack.c.b16 %v129, %v127
    %v150 = vpack.c.b16 %v130, %v128
    %v151 = vpack.c.b16 %v133, %v131
    %v152 = vpack.c.b16 %v134, %v132
    %v153 = vpack.c.b16 %v137, %v135
    %v154 = vpack.c.b16 %v138, %v136
    %171 = vmatprep.subr.bf16.mxu0 %v154
    %172 = vmatpush1.bf16.msra.mxu0 %v153
    %173 = vmatprep.subr.bf16.mxu0 %v152
    %174 = vmatpush1.bf16.msra.mxu0 %v151
    %175 = vmatprep.subr.bf16.mxu0 %v150
    %176 = vmatpush1.bf16.msra.mxu0 %v149
    %177 = vmatprep.subr.bf16.mxu0 %v148
    %178 = vmatpush1.bf16.msra.mxu0 %v147
    %179 = vmatprep.subr.bf16.mxu0 %v146
    %180 = vmatpush1.bf16.msra.mxu0 %v145
    %181 = vmatprep.subr.bf16.mxu0 %v144
    %182 = vmatpush1.bf16.msra.mxu0 %v143
    %183 = vmatprep.subr.bf16.mxu0 %v142
    %184 = vmatpush1.bf16.msra.mxu0 %v141
    %185 = vmatprep.subr.bf16.mxu0 %v140
    %186 = vmatpush1.bf16.msra.mxu0 %v139
    %187 = vmatprep.subr.bf16.mxu0 0
    %188 = vmatpush2.bf16.msra.mxu0 0
    %189 = vmatprep.subr.bf16.mxu0 0
    %190 = vmatpush2.bf16.msra.mxu0 0
    %191 = vmatprep.subr.bf16.mxu0 0
    %192 = vmatpush2.bf16.msra.mxu0 0
    %193 = vmatprep.subr.bf16.mxu0 0
    %194 = vmatpush2.bf16.msra.mxu0 0
    %195 = vmatprep.subr.bf16.mxu0 0
    %196 = vmatpush2.bf16.msra.mxu0 0
    %197 = vmatprep.subr.bf16.mxu0 0
    %198 = vmatpush2.bf16.msra.mxu0 0
    %199 = vmatprep.subr.bf16.mxu0 0
    %200 = vmatpush2.bf16.msra.mxu0 0
    %201 = vmatprep.subr.bf16.mxu0 0
    %202 = vmatpush2.bf16.msra.mxu0 0
    %203 = vmatprep.mubr.bf16.mxu0 0
    %204 = vmatmul.mubr.bf16.gmra.mxu0 %v62
    %v205 = vpop.f32.mrf.mxu0
    %v206 = vadd.f32 %v84, %v205
    %v207 = vpop.f32.mrf.mxu0
    %v208 = vadd.f32 %v88, %v207
    %v209 = vpop.f32.mrf.mxu0
    %v210 = vpop.f32.mrf.mxu0
    %211 = vdwg.mxu0
    %v212 = vmax.f32 %v206, 0.0
    %v213 = vmax.f32 %v208, 0.0
    %v214 = vpack.c.bf16 %v212, %v212
    %v215 = vpack.c.bf16 %v213, %v213
    %v216 = vld [vmem:[#allocation2] sm:$0xff]
    %v217 = vld [vmem:[#allocation2 + $0x8] sm:$0xff]
    %v218 = vld [vmem:[#allocation2 + $0x10] sm:$0xff]
    %v219 = vld [vmem:[#allocation2 + $0x18] sm:$0xff]
    %v220 = vld [vmem:[#allocation2 + $0x20] sm:$0xff]
    %v221 = vld [vmem:[#allocation2 + $0x28] sm:$0xff]
    %v222 = vld [vmem:[#allocation2 + $0x30] sm:$0xff]
    %v223 = vld [vmem:[#allocation2 + $0x38] sm:$0xff]
    %v224 = vld [vmem:[#allocation2 + $0x40] sm:$0xff]
    %v225 = vld [vmem:[#allocation2 + $0x48] sm:$0xff]
    %v226 = vld [vmem:[#allocation2 + $0x50] sm:$0xff]
    %v227 = vld [vmem:[#allocation2 + $0x58] sm:$0xff]
    %v228 = vld [vmem:[#allocation2 + $0x60] sm:$0xff]
    %v229 = vld [vmem:[#allocation2 + $0x68] sm:$0xff]
    %v230 = vld [vmem:[#allocation2 + $0x70] sm:$0xff]
    %v231 = vld [vmem:[#allocation2 + $0x78] sm:$0xff]
    %v232 = vld [vmem:[#allocation2 + $0x80] sm:$0xff]
    %v233 = vld [vmem:[#allocation2 + $0x88] sm:$0xff]
    %v234 = vld [vmem:[#allocation2 + $0x90] sm:$0xff]
    %v235 = vld [vmem:[#allocation2 + $0x98] sm:$0xff]
    %v236 = vld [vmem:[#allocation2 + $0xa0] sm:$0xff]
    %v237 = vld [vmem:[#allocation2 + $0xa8] sm:$0xff]
    %v238 = vld [vmem:[#allocation2 + $0xb0] sm:$0xff]
    %v239 = vld [vmem:[#allocation2 + $0xb8] sm:$0xff]
    %v240 = vld [vmem:[#allocation2 + $0xc0] sm:$0xff]
    %v241 = vld [vmem:[#allocation2 + $0xc8] sm:$0xff]
    %v242 = vld [vmem:[#allocation2 + $0xd0] sm:$0xff]
    %v243 = vld [vmem:[#allocation2 + $0xd8] sm:$0xff]
    %v244 = vld [vmem:[#allocation2 + $0xe0] sm:$0xff]
    %v245 = vld [vmem:[#allocation2 + $0xe8] sm:$0xff]
    %v246 = vld [vmem:[#allocation2 + $0xf0] sm:$0xff]
    %v247 = vld [vmem:[#allocation2 + $0xf8] sm:$0xff]
    %v248 = vld [vmem:[#allocation2 + $0x100] sm:$0xff]
    %v249 = vld [vmem:[#allocation2 + $0x108] sm:$0xff]
    %v250 = vld [vmem:[#allocation2 + $0x110] sm:$0xff]
    %v251 = vld [vmem:[#allocation2 + $0x118] sm:$0xff]
    %v252 = vld [vmem:[#allocation2 + $0x120] sm:$0xff]
    %v253 = vld [vmem:[#allocation2 + $0x128] sm:$0xff]
    %v254 = vld [vmem:[#allocation2 + $0x130] sm:$0xff]
    %v255 = vld [vmem:[#allocation2 + $0x138] sm:$0xff]
    %v256 = vld [vmem:[#allocation2 + $0x140] sm:$0xff]
    %v257 = vld [vmem:[#allocation2 + $0x148] sm:$0xff]
    %v258 = vld [vmem:[#allocation2 + $0x150] sm:$0xff]
    %v259 = vld [vmem:[#allocation2 + $0x158] sm:$0xff]
    %v260 = vld [vmem:[#allocation2 + $0x160] sm:$0xff]
    %v261 = vld [vmem:[#allocation2 + $0x168] sm:$0xff]
    %v262 = vld [vmem:[#allocation2 + $0x170] sm:$0xff]
    %v263 = vld [vmem:[#allocation2 + $0x178] sm:$0xff]
    %v264 = vld [vmem:[#allocation2 + $0x180] sm:$0xff]
    %v265 = vld [vmem:[#allocation2 + $0x188] sm:$0xff]
    %v266 = vld [vmem:[#allocation2 + $0x190] sm:$0xff]
    %v267 = vld [vmem:[#allocation2 + $0x198] sm:$0xff]
    %v268 = vld [vmem:[#allocation2 + $0x1a0] sm:$0xff]
    %v269 = vld [vmem:[#allocation2 + $0x1a8] sm:$0xff]
    %v270 = vld [vmem:[#allocation2 + $0x1b0] sm:$0xff]
    %v271 = vld [vmem:[#allocation2 + $0x1b8] sm:$0xff]
    %v272 = vld [vmem:[#allocation2 + $0x1c0] sm:$0xff]
    %v273 = vld [vmem:[#allocation2 + $0x1c8] sm:$0xff]
    %v274 = vld [vmem:[#allocation2 + $0x1d0] sm:$0xff]
    %v275 = vld [vmem:[#allocation2 + $0x1d8] sm:$0xff]
    %v276 = vld [vmem:[#allocation2 + $0x1e0] sm:$0xff]
    %v277 = vld [vmem:[#allocation2 + $0x1e8] sm:$0xff]
    %v278 = vld [vmem:[#allocation2 + $0x1f0] sm:$0xff]
    %v279 = vld [vmem:[#allocation2 + $0x1f8] sm:$0xff]
    %v280 = vld [vmem:[%s4] sm:$0xf]
    %v282 = vlaneseq
    %v283 = vshrl.u32 %v282, 7
    %v284 = vsub.s32 0, %v283
    %v285 = vrot.slane %v280, %v284
    %v286 = vlaneseq
    %v287 = vshrl.u32 %v286, 7
    %v288 = vsub.s32 1, %v287
    %v289 = vrot.slane %v280, %v288
    %v290 = vlaneseq
    %v291 = vshrl.u32 %v290, 7
    %v292 = vsub.s32 2, %v291
    %v293 = vrot.slane %v280, %v292
    %v294 = vlaneseq
    %v295 = vshrl.u32 %v294, 7
    %v296 = vsub.s32 3, %v295
    %v297 = vrot.slane %v280, %v296
    %v366 = vunpack.c.l.b16 %v216
    %v367 = vunpack.c.h.b16 %v216
    %v368 = vunpack.c.l.b16 %v217
    %v369 = vunpack.c.h.b16 %v217
    %v370 = vunpack.c.l.b16 %v218
    %v371 = vunpack.c.h.b16 %v218
    %v372 = vunpack.c.l.b16 %v219
    %v373 = vunpack.c.h.b16 %v219
    %v374 = vunpack.c.l.b16 %v220
    %v375 = vunpack.c.h.b16 %v220
    %v376 = vunpack.c.l.b16 %v221
    %v377 = vunpack.c.h.b16 %v221
    %v378 = vunpack.c.l.b16 %v222
    %v379 = vunpack.c.h.b16 %v222
    %v380 = vunpack.c.l.b16 %v223
    %v381 = vunpack.c.h.b16 %v223
    %v382 = vunpack.c.l.b16 %v224
    %v383 = vunpack.c.h.b16 %v224
    %v384 = vunpack.c.l.b16 %v225
    %v385 = vunpack.c.h.b16 %v225
    %v386 = vunpack.c.l.b16 %v226
    %v387 = vunpack.c.h.b16 %v226
    %v388 = vunpack.c.l.b16 %v227
    %v389 = vunpack.c.h.b16 %v227
    %v390 = vunpack.c.l.b16 %v228
    %v391 = vunpack.c.h.b16 %v228
    %v392 = vunpack.c.l.b16 %v229
    %v393 = vunpack.c.h.b16 %v229
    %v394 = vunpack.c.l.b16 %v230
    %v395 = vunpack.c.h.b16 %v230
    %v396 = vunpack.c.l.b16 %v231
    %v397 = vunpack.c.h.b16 %v231
    %v398 = vunpack.c.l.b16 %v232
    %v399 = vunpack.c.h.b16 %v232
    %v400 = vunpack.c.l.b16 %v233
    %v401 = vunpack.c.h.b16 %v233
    %v402 = vunpack.c.l.b16 %v234
    %v403 = vunpack.c.h.b16 %v234
    %v404 = vunpack.c.l.b16 %v235
    %v405 = vunpack.c.h.b16 %v235
    %v406 = vunpack.c.l.b16 %v236
    %v407 = vunpack.c.h.b16 %v236
    %v408 = vunpack.c.l.b16 %v237
    %v409 = vunpack.c.h.b16 %v237
    %v410 = vunpack.c.l.b16 %v238
    %v411 = vunpack.c.h.b16 %v238
    %v412 = vunpack.c.l.b16 %v239
    %v413 = vunpack.c.h.b16 %v239
    %v414 = vunpack.c.l.b16 %v240
    %v415 = vunpack.c.h.b16 %v240
    %v416 = vunpack.c.l.b16 %v241
    %v417 = vunpack.c.h.b16 %v241
    %v418 = vunpack.c.l.b16 %v242
    %v419 = vunpack.c.h.b16 %v242
    %v420 = vunpack.c.l.b16 %v243
    %v421 = vunpack.c.h.b16 %v243
    %v422 = vunpack.c.l.b16 %v244
    %v423 = vunpack.c.h.b16 %v244
    %v424 = vunpack.c.l.b16 %v245
    %v425 = vunpack.c.h.b16 %v245
    %v426 = vunpack.c.l.b16 %v246
    %v427 = vunpack.c.h.b16 %v246
    %v428 = vunpack.c.l.b16 %v247
    %v429 = vunpack.c.h.b16 %v247
    %v430 = vunpack.c.l.b16 %v248
    %v431 = vunpack.c.h.b16 %v248
    %v432 = vunpack.c.l.b16 %v249
    %v433 = vunpack.c.h.b16 %v249
    %v434 = vunpack.c.l.b16 %v250
    %v435 = vunpack.c.h.b16 %v250
    %v436 = vunpack.c.l.b16 %v251
    %v437 = vunpack.c.h.b16 %v251
    %v438 = vunpack.c.l.b16 %v252
    %v439 = vunpack.c.h.b16 %v252
    %v440 = vunpack.c.l.b16 %v253
    %v441 = vunpack.c.h.b16 %v253
    %v442 = vunpack.c.l.b16 %v254
    %v443 = vunpack.c.h.b16 %v254
    %v444 = vunpack.c.l.b16 %v255
    %v445 = vunpack.c.h.b16 %v255
    %v446 = vunpack.c.l.b16 %v256
    %v447 = vunpack.c.h.b16 %v256
    %v448 = vunpack.c.l.b16 %v257
    %v449 = vunpack.c.h.b16 %v257
    %v450 = vunpack.c.l.b16 %v258
    %v451 = vunpack.c.h.b16 %v258
    %v452 = vunpack.c.l.b16 %v259
    %v453 = vunpack.c.h.b16 %v259
    %v454 = vunpack.c.l.b16 %v260
    %v455 = vunpack.c.h.b16 %v260
    %v456 = vunpack.c.l.b16 %v261
    %v457 = vunpack.c.h.b16 %v261
    %v458 = vunpack.c.l.b16 %v262
    %v459 = vunpack.c.h.b16 %v262
    %v460 = vunpack.c.l.b16 %v263
    %v461 = vunpack.c.h.b16 %v263
    %v462 = vunpack.c.l.b16 %v264
    %v463 = vunpack.c.h.b16 %v264
    %v464 = vunpack.c.l.b16 %v265
    %v465 = vunpack.c.h.b16 %v265
    %v466 = vunpack.c.l.b16 %v266
    %v467 = vunpack.c.h.b16 %v266
    %v468 = vunpack.c.l.b16 %v267
    %v469 = vunpack.c.h.b16 %v267
    %v470 = vunpack.c.l.b16 %v268
    %v471 = vunpack.c.h.b16 %v268
    %v472 = vunpack.c.l.b16 %v269
    %v473 = vunpack.c.h.b16 %v269
    %v474 = vunpack.c.l.b16 %v270
    %v475 = vunpack.c.h.b16 %v270
    %v476 = vunpack.c.l.b16 %v271
    %v477 = vunpack.c.h.b16 %v271
    %v478 = vunpack.c.l.b16 %v272
    %v479 = vunpack.c.h.b16 %v272
    %v480 = vunpack.c.l.b16 %v273
    %v481 = vunpack.c.h.b16 %v273
    %v482 = vunpack.c.l.b16 %v274
    %v483 = vunpack.c.h.b16 %v274
    %v484 = vunpack.c.l.b16 %v275
    %v485 = vunpack.c.h.b16 %v275
    %v486 = vunpack.c.l.b16 %v276
    %v487 = vunpack.c.h.b16 %v276
    %v488 = vunpack.c.l.b16 %v277
    %v489 = vunpack.c.h.b16 %v277
    %v490 = vunpack.c.l.b16 %v278
    %v491 = vunpack.c.h.b16 %v278
    %v492 = vunpack.c.l.b16 %v279
    %v493 = vunpack.c.h.b16 %v279
    %v494 = vpack.c.b16 %v370, %v366
    %v495 = vpack.c.b16 %v371, %v367
    %v496 = vpack.c.b16 %v372, %v368
    %v497 = vpack.c.b16 %v373, %v369
    %v498 = vpack.c.b16 %v378, %v374
    %v499 = vpack.c.b16 %v379, %v375
    %v500 = vpack.c.b16 %v380, %v376
    %v501 = vpack.c.b16 %v381, %v377
    %v502 = vpack.c.b16 %v386, %v382
    %v503 = vpack.c.b16 %v387, %v383
    %v504 = vpack.c.b16 %v388, %v384
    %v505 = vpack.c.b16 %v389, %v385
    %v506 = vpack.c.b16 %v394, %v390
    %v507 = vpack.c.b16 %v395, %v391
    %v508 = vpack.c.b16 %v396, %v392
    %v509 = vpack.c.b16 %v397, %v393
    %v510 = vpack.c.b16 %v402, %v398
    %v511 = vpack.c.b16 %v403, %v399
    %v512 = vpack.c.b16 %v404, %v400
    %v513 = vpack.c.b16 %v405, %v401
    %v514 = vpack.c.b16 %v410, %v406
    %v515 = vpack.c.b16 %v411, %v407
    %v516 = vpack.c.b16 %v412, %v408
    %v517 = vpack.c.b16 %v413, %v409
    %v518 = vpack.c.b16 %v418, %v414
    %v519 = vpack.c.b16 %v419, %v415
    %v520 = vpack.c.b16 %v420, %v416
    %v521 = vpack.c.b16 %v421, %v417
    %v522 = vpack.c.b16 %v426, %v422
    %v523 = vpack.c.b16 %v427, %v423
    %v524 = vpack.c.b16 %v428, %v424
    %v525 = vpack.c.b16 %v429, %v425
    %v526 = vpack.c.b16 %v434, %v430
    %v527 = vpack.c.b16 %v435, %v431
    %v528 = vpack.c.b16 %v436, %v432
    %v529 = vpack.c.b16 %v437, %v433
    %v530 = vpack.c.b16 %v442, %v438
    %v531 = vpack.c.b16 %v443, %v439
    %v532 = vpack.c.b16 %v444, %v440
    %v533 = vpack.c.b16 %v445, %v441
    %v534 = vpack.c.b16 %v450, %v446
    %v535 = vpack.c.b16 %v451, %v447
    %v536 = vpack.c.b16 %v452, %v448
    %v537 = vpack.c.b16 %v453, %v449
    %v538 = vpack.c.b16 %v458, %v454
    %v539 = vpack.c.b16 %v459, %v455
    %v540 = vpack.c.b16 %v460, %v456
    %v541 = vpack.c.b16 %v461, %v457
    %v542 = vpack.c.b16 %v466, %v462
    %v543 = vpack.c.b16 %v467, %v463
    %v544 = vpack.c.b16 %v468, %v464
    %v545 = vpack.c.b16 %v469, %v465
    %v546 = vpack.c.b16 %v474, %v470
    %v547 = vpack.c.b16 %v475, %v471
    %v548 = vpack.c.b16 %v476, %v472
    %v549 = vpack.c.b16 %v477, %v473
    %v550 = vpack.c.b16 %v482, %v478
    %v551 = vpack.c.b16 %v483, %v479
    %v552 = vpack.c.b16 %v484, %v480
    %v553 = vpack.c.b16 %v485, %v481
    %v554 = vpack.c.b16 %v490, %v486
    %v555 = vpack.c.b16 %v491, %v487
    %v556 = vpack.c.b16 %v492, %v488
    %v557 = vpack.c.b16 %v493, %v489
    %622 = vmatprep.subr.bf16.mxu0 %v523
    %623 = vmatpush1.bf16.msra.mxu0 %v522
    %624 = vmatprep.subr.bf16.mxu0 %v519
    %625 = vmatpush1.bf16.msra.mxu0 %v518
    %626 = vmatprep.subr.bf16.mxu0 %v515
    %627 = vmatpush1.bf16.msra.mxu0 %v514
    %628 = vmatprep.subr.bf16.mxu0 %v511
    %629 = vmatpush1.bf16.msra.mxu0 %v510
    %630 = vmatprep.subr.bf16.mxu0 %v507
    %631 = vmatpush1.bf16.msra.mxu0 %v506
    %632 = vmatprep.subr.bf16.mxu0 %v503
    %633 = vmatpush1.bf16.msra.mxu0 %v502
    %634 = vmatprep.subr.bf16.mxu0 %v499
    %635 = vmatpush1.bf16.msra.mxu0 %v498
    %636 = vmatprep.subr.bf16.mxu0 %v495
    %637 = vmatpush1.bf16.msra.mxu0 %v494
    %638 = vmatprep.subr.bf16.mxu0 %v555
    %639 = vmatpush2.bf16.msra.mxu0 %v554
    %640 = vmatprep.subr.bf16.mxu0 %v551
    %641 = vmatpush2.bf16.msra.mxu0 %v550
    %642 = vmatprep.subr.bf16.mxu0 %v547
    %643 = vmatpush2.bf16.msra.mxu0 %v546
    %644 = vmatprep.subr.bf16.mxu0 %v543
    %645 = vmatpush2.bf16.msra.mxu0 %v542
    %646 = vmatprep.subr.bf16.mxu0 %v539
    %647 = vmatpush2.bf16.msra.mxu0 %v538
    %648 = vmatprep.subr.bf16.mxu0 %v535
    %649 = vmatpush2.bf16.msra.mxu0 %v534
    %650 = vmatprep.subr.bf16.mxu0 %v531
    %651 = vmatpush2.bf16.msra.mxu0 %v530
    %652 = vmatprep.subr.bf16.mxu0 %v527
    %653 = vmatpush2.bf16.msra.mxu0 %v526
    %654 = vmatprep.mubr.bf16.mxu0 %v215
    %655 = vmatmul.mubr.bf16.gmra.mxu0 %v214
    %v656 = vpop.f32.mrf.mxu0
    %v657 = vadd.f32 %v285, %v656
    %v658 = vpop.f32.mrf.mxu0
    %v659 = vadd.f32 %v289, %v658
    %v660 = vpop.f32.mrf.mxu0
    %v661 = vpop.f32.mrf.mxu0
    %662 = vdwg.mxu0
    %663 = vmatprep.subr.bf16.mxu0 %v525
    %664 = vmatpush1.bf16.msra.mxu0 %v524
    %665 = vmatprep.subr.bf16.mxu0 %v521
    %666 = vmatpush1.bf16.msra.mxu0 %v520
    %667 = vmatprep.subr.bf16.mxu0 %v517
    %668 = vmatpush1.bf16.msra.mxu0 %v516
    %669 = vmatprep.subr.bf16.mxu0 %v513
    %670 = vmatpush1.bf16.msra.mxu0 %v512
    %671 = vmatprep.subr.bf16.mxu0 %v509
    %672 = vmatpush1.bf16.msra.mxu0 %v508
    %673 = vmatprep.subr.bf16.mxu0 %v505
    %674 = vmatpush1.bf16.msra.mxu0 %v504
    %675 = vmatprep.subr.bf16.mxu0 %v501
    %676 = vmatpush1.bf16.msra.mxu0 %v500
    %677 = vmatprep.subr.bf16.mxu0 %v497
    %678 = vmatpush1.bf16.msra.mxu0 %v496
    %679 = vmatprep.subr.bf16.mxu0 %v557
    %680 = vmatpush2.bf16.msra.mxu0 %v556
    %681 = vmatprep.subr.bf16.mxu0 %v553
    %682 = vmatpush2.bf16.msra.mxu0 %v552
    %683 = vmatprep.subr.bf16.mxu0 %v549
    %684 = vmatpush2.bf16.msra.mxu0 %v548
    %685 = vmatprep.subr.bf16.mxu0 %v545
    %686 = vmatpush2.bf16.msra.mxu0 %v544
    %687 = vmatprep.subr.bf16.mxu0 %v541
    %688 = vmatpush2.bf16.msra.mxu0 %v540
    %689 = vmatprep.subr.bf16.mxu0 %v537
    %690 = vmatpush2.bf16.msra.mxu0 %v536
    %691 = vmatprep.subr.bf16.mxu0 %v533
    %692 = vmatpush2.bf16.msra.mxu0 %v532
    %693 = vmatprep.subr.bf16.mxu0 %v529
    %694 = vmatpush2.bf16.msra.mxu0 %v528
    %695 = vmatprep.mubr.bf16.mxu0 %v215
    %696 = vmatmul.mubr.bf16.gmra.mxu0 %v214
    %v697 = vpop.f32.mrf.mxu0
    %v698 = vadd.f32 %v293, %v697
    %v699 = vpop.f32.mrf.mxu0
    %v700 = vadd.f32 %v297, %v699
    %v701 = vpop.f32.mrf.mxu0
    %v702 = vpop.f32.mrf.mxu0
    %703 = vdwg.mxu0
    %v704 = vmax.f32 %v657, 0.0
    %v705 = vmax.f32 %v659, 0.0
    %v706 = vmax.f32 %v698, 0.0
    %v707 = vmax.f32 %v700, 0.0
    %v708 = vpack.c.bf16 %v704, %v704
    %v709 = vpack.c.bf16 %v705, %v705
    %v710 = vpack.c.bf16 %v706, %v706
    %v711 = vpack.c.bf16 %v707, %v707
    %v712 = vld [vmem:[#allocation5] sm:$0xff]
    %v713 = vld [vmem:[#allocation5 + $0x8] sm:$0xff]
    %v714 = vld [vmem:[#allocation5 + $0x10] sm:$0xff]
    %v715 = vld [vmem:[#allocation5 + $0x18] sm:$0xff]
    %v716 = vld [vmem:[#allocation5 + $0x20] sm:$0xff]
    %v717 = vld [vmem:[#allocation5 + $0x28] sm:$0xff]
    %v718 = vld [vmem:[#allocation5 + $0x30] sm:$0xff]
    %v719 = vld [vmem:[#allocation5 + $0x38] sm:$0xff]
    %v720 = vld [vmem:[#allocation5 + $0x40] sm:$0xff]
    %v721 = vld [vmem:[#allocation5 + $0x48] sm:$0xff]
    %v722 = vld [vmem:[#allocation5 + $0x50] sm:$0xff]
    %v723 = vld [vmem:[#allocation5 + $0x58] sm:$0xff]
    %v724 = vld [vmem:[#allocation5 + $0x60] sm:$0xff]
    %v725 = vld [vmem:[#allocation5 + $0x68] sm:$0xff]
    %v726 = vld [vmem:[#allocation5 + $0x70] sm:$0xff]
    %v727 = vld [vmem:[#allocation5 + $0x78] sm:$0xff]
    %v728 = vld [vmem:[#allocation5 + $0x80] sm:$0xff]
    %v729 = vld [vmem:[#allocation5 + $0x88] sm:$0xff]
    %v730 = vld [vmem:[#allocation5 + $0x90] sm:$0xff]
    %v731 = vld [vmem:[#allocation5 + $0x98] sm:$0xff]
    %v732 = vld [vmem:[#allocation5 + $0xa0] sm:$0xff]
    %v733 = vld [vmem:[#allocation5 + $0xa8] sm:$0xff]
    %v734 = vld [vmem:[#allocation5 + $0xb0] sm:$0xff]
    %v735 = vld [vmem:[#allocation5 + $0xb8] sm:$0xff]
    %v736 = vld [vmem:[#allocation5 + $0xc0] sm:$0xff]
    %v737 = vld [vmem:[#allocation5 + $0xc8] sm:$0xff]
    %v738 = vld [vmem:[#allocation5 + $0xd0] sm:$0xff]
    %v739 = vld [vmem:[#allocation5 + $0xd8] sm:$0xff]
    %v740 = vld [vmem:[#allocation5 + $0xe0] sm:$0xff]
    %v741 = vld [vmem:[#allocation5 + $0xe8] sm:$0xff]
    %v742 = vld [vmem:[#allocation5 + $0xf0] sm:$0xff]
    %v743 = vld [vmem:[#allocation5 + $0xf8] sm:$0xff]
    %v744 = vld [vmem:[#allocation5 + $0x100] sm:$0xff]
    %v745 = vld [vmem:[#allocation5 + $0x108] sm:$0xff]
    %v746 = vld [vmem:[#allocation5 + $0x110] sm:$0xff]
    %v747 = vld [vmem:[#allocation5 + $0x118] sm:$0xff]
    %v748 = vld [vmem:[#allocation5 + $0x120] sm:$0xff]
    %v749 = vld [vmem:[#allocation5 + $0x128] sm:$0xff]
    %v750 = vld [vmem:[#allocation5 + $0x130] sm:$0xff]
    %v751 = vld [vmem:[#allocation5 + $0x138] sm:$0xff]
    %v752 = vld [vmem:[#allocation5 + $0x140] sm:$0xff]
    %v753 = vld [vmem:[#allocation5 + $0x148] sm:$0xff]
    %v754 = vld [vmem:[#allocation5 + $0x150] sm:$0xff]
    %v755 = vld [vmem:[#allocation5 + $0x158] sm:$0xff]
    %v756 = vld [vmem:[#allocation5 + $0x160] sm:$0xff]
    %v757 = vld [vmem:[#allocation5 + $0x168] sm:$0xff]
    %v758 = vld [vmem:[#allocation5 + $0x170] sm:$0xff]
    %v759 = vld [vmem:[#allocation5 + $0x178] sm:$0xff]
    %v760 = vld [vmem:[#allocation5 + $0x180] sm:$0xff]
    %v761 = vld [vmem:[#allocation5 + $0x188] sm:$0xff]
    %v762 = vld [vmem:[#allocation5 + $0x190] sm:$0xff]
    %v763 = vld [vmem:[#allocation5 + $0x198] sm:$0xff]
    %v764 = vld [vmem:[#allocation5 + $0x1a0] sm:$0xff]
    %v765 = vld [vmem:[#allocation5 + $0x1a8] sm:$0xff]
    %v766 = vld [vmem:[#allocation5 + $0x1b0] sm:$0xff]
    %v767 = vld [vmem:[#allocation5 + $0x1b8] sm:$0xff]
    %v768 = vld [vmem:[#allocation5 + $0x1c0] sm:$0xff]
    %v769 = vld [vmem:[#allocation5 + $0x1c8] sm:$0xff]
    %v770 = vld [vmem:[#allocation5 + $0x1d0] sm:$0xff]
    %v771 = vld [vmem:[#allocation5 + $0x1d8] sm:$0xff]
    %v772 = vld [vmem:[#allocation5 + $0x1e0] sm:$0xff]
    %v773 = vld [vmem:[#allocation5 + $0x1e8] sm:$0xff]
    %v774 = vld [vmem:[#allocation5 + $0x1f0] sm:$0xff]
    %v775 = vld [vmem:[#allocation5 + $0x1f8] sm:$0xff]
    %v776 = vld [vmem:[%s6] sm:$0x3]
    %v778 = vlaneseq
    %v779 = vshrl.u32 %v778, 7
    %v780 = vsub.s32 0, %v779
    %v781 = vrot.slane %v776, %v780
    %v782 = vlaneseq
    %v783 = vshrl.u32 %v782, 7
    %v784 = vsub.s32 1, %v783
    %v785 = vrot.slane %v776, %v784
    %v852 = vunpack.c.l.b16 %v712
    %v853 = vunpack.c.h.b16 %v712
    %v854 = vunpack.c.l.b16 %v713
    %v855 = vunpack.c.h.b16 %v713
    %v856 = vunpack.c.l.b16 %v714
    %v857 = vunpack.c.h.b16 %v714
    %v858 = vunpack.c.l.b16 %v715
    %v859 = vunpack.c.h.b16 %v715
    %v860 = vunpack.c.l.b16 %v716
    %v861 = vunpack.c.h.b16 %v716
    %v862 = vunpack.c.l.b16 %v717
    %v863 = vunpack.c.h.b16 %v717
    %v864 = vunpack.c.l.b16 %v718
    %v865 = vunpack.c.h.b16 %v718
    %v866 = vunpack.c.l.b16 %v719
    %v867 = vunpack.c.h.b16 %v719
    %v868 = vunpack.c.l.b16 %v720
    %v869 = vunpack.c.h.b16 %v720
    %v870 = vunpack.c.l.b16 %v721
    %v871 = vunpack.c.h.b16 %v721
    %v872 = vunpack.c.l.b16 %v722
    %v873 = vunpack.c.h.b16 %v722
    %v874 = vunpack.c.l.b16 %v723
    %v875 = vunpack.c.h.b16 %v723
    %v876 = vunpack.c.l.b16 %v724
    %v877 = vunpack.c.h.b16 %v724
    %v878 = vunpack.c.l.b16 %v725
    %v879 = vunpack.c.h.b16 %v725
    %v880 = vunpack.c.l.b16 %v726
    %v881 = vunpack.c.h.b16 %v726
    %v882 = vunpack.c.l.b16 %v727
    %v883 = vunpack.c.h.b16 %v727
    %v884 = vunpack.c.l.b16 %v728
    %v885 = vunpack.c.h.b16 %v728
    %v886 = vunpack.c.l.b16 %v729
    %v887 = vunpack.c.h.b16 %v729
    %v888 = vunpack.c.l.b16 %v730
    %v889 = vunpack.c.h.b16 %v730
    %v890 = vunpack.c.l.b16 %v731
    %v891 = vunpack.c.h.b16 %v731
    %v892 = vunpack.c.l.b16 %v732
    %v893 = vunpack.c.h.b16 %v732
    %v894 = vunpack.c.l.b16 %v733
    %v895 = vunpack.c.h.b16 %v733
    %v896 = vunpack.c.l.b16 %v734
    %v897 = vunpack.c.h.b16 %v734
    %v898 = vunpack.c.l.b16 %v735
    %v899 = vunpack.c.h.b16 %v735
    %v900 = vunpack.c.l.b16 %v736
    %v901 = vunpack.c.h.b16 %v736
    %v902 = vunpack.c.l.b16 %v737
    %v903 = vunpack.c.h.b16 %v737
    %v904 = vunpack.c.l.b16 %v738
    %v905 = vunpack.c.h.b16 %v738
    %v906 = vunpack.c.l.b16 %v739
    %v907 = vunpack.c.h.b16 %v739
    %v908 = vunpack.c.l.b16 %v740
    %v909 = vunpack.c.h.b16 %v740
    %v910 = vunpack.c.l.b16 %v741
    %v911 = vunpack.c.h.b16 %v741
    %v912 = vunpack.c.l.b16 %v742
    %v913 = vunpack.c.h.b16 %v742
    %v914 = vunpack.c.l.b16 %v743
    %v915 = vunpack.c.h.b16 %v743
    %v916 = vunpack.c.l.b16 %v744
    %v917 = vunpack.c.h.b16 %v744
    %v918 = vunpack.c.l.b16 %v745
    %v919 = vunpack.c.h.b16 %v745
    %v920 = vunpack.c.l.b16 %v746
    %v921 = vunpack.c.h.b16 %v746
    %v922 = vunpack.c.l.b16 %v747
    %v923 = vunpack.c.h.b16 %v747
    %v924 = vunpack.c.l.b16 %v748
    %v925 = vunpack.c.h.b16 %v748
    %v926 = vunpack.c.l.b16 %v749
    %v927 = vunpack.c.h.b16 %v749
    %v928 = vunpack.c.l.b16 %v750
    %v929 = vunpack.c.h.b16 %v750
    %v930 = vunpack.c.l.b16 %v751
    %v931 = vunpack.c.h.b16 %v751
    %v932 = vunpack.c.l.b16 %v752
    %v933 = vunpack.c.h.b16 %v752
    %v934 = vunpack.c.l.b16 %v753
    %v935 = vunpack.c.h.b16 %v753
    %v936 = vunpack.c.l.b16 %v754
    %v937 = vunpack.c.h.b16 %v754
    %v938 = vunpack.c.l.b16 %v755
    %v939 = vunpack.c.h.b16 %v755
    %v940 = vunpack.c.l.b16 %v756
    %v941 = vunpack.c.h.b16 %v756
    %v942 = vunpack.c.l.b16 %v757
    %v943 = vunpack.c.h.b16 %v757
    %v944 = vunpack.c.l.b16 %v758
    %v945 = vunpack.c.h.b16 %v758
    %v946 = vunpack.c.l.b16 %v759
    %v947 = vunpack.c.h.b16 %v759
    %v948 = vunpack.c.l.b16 %v760
    %v949 = vunpack.c.h.b16 %v760
    %v950 = vunpack.c.l.b16 %v761
    %v951 = vunpack.c.h.b16 %v761
    %v952 = vunpack.c.l.b16 %v762
    %v953 = vunpack.c.h.b16 %v762
    %v954 = vunpack.c.l.b16 %v763
    %v955 = vunpack.c.h.b16 %v763
    %v956 = vunpack.c.l.b16 %v764
    %v957 = vunpack.c.h.b16 %v764
    %v958 = vunpack.c.l.b16 %v765
    %v959 = vunpack.c.h.b16 %v765
    %v960 = vunpack.c.l.b16 %v766
    %v961 = vunpack.c.h.b16 %v766
    %v962 = vunpack.c.l.b16 %v767
    %v963 = vunpack.c.h.b16 %v767
    %v964 = vunpack.c.l.b16 %v768
    %v965 = vunpack.c.h.b16 %v768
    %v966 = vunpack.c.l.b16 %v769
    %v967 = vunpack.c.h.b16 %v769
    %v968 = vunpack.c.l.b16 %v770
    %v969 = vunpack.c.h.b16 %v770
    %v970 = vunpack.c.l.b16 %v771
    %v971 = vunpack.c.h.b16 %v771
    %v972 = vunpack.c.l.b16 %v772
    %v973 = vunpack.c.h.b16 %v772
    %v974 = vunpack.c.l.b16 %v773
    %v975 = vunpack.c.h.b16 %v773
    %v976 = vunpack.c.l.b16 %v774
    %v977 = vunpack.c.h.b16 %v774
    %v978 = vunpack.c.l.b16 %v775
    %v979 = vunpack.c.h.b16 %v775
    %v980 = vpack.c.b16 %v854, %v852
    %v981 = vpack.c.b16 %v855, %v853
    %v982 = vpack.c.b16 %v858, %v856
    %v983 = vpack.c.b16 %v859, %v857
    %v984 = vpack.c.b16 %v862, %v860
    %v985 = vpack.c.b16 %v863, %v861
    %v986 = vpack.c.b16 %v866, %v864
    %v987 = vpack.c.b16 %v867, %v865
    %v988 = vpack.c.b16 %v870, %v868
    %v989 = vpack.c.b16 %v871, %v869
    %v990 = vpack.c.b16 %v874, %v872
    %v991 = vpack.c.b16 %v875, %v873
    %v992 = vpack.c.b16 %v878, %v876
    %v993 = vpack.c.b16 %v879, %v877
    %v994 = vpack.c.b16 %v882, %v880
    %v995 = vpack.c.b16 %v883, %v881
    %v996 = vpack.c.b16 %v886, %v884
    %v997 = vpack.c.b16 %v887, %v885
    %v998 = vpack.c.b16 %v890, %v888
    %v999 = vpack.c.b16 %v891, %v889
    %v1000 = vpack.c.b16 %v894, %v892
    %v1001 = vpack.c.b16 %v895, %v893
    %v1002 = vpack.c.b16 %v898, %v896
    %v1003 = vpack.c.b16 %v899, %v897
    %v1004 = vpack.c.b16 %v902, %v900
    %v1005 = vpack.c.b16 %v903, %v901
    %v1006 = vpack.c.b16 %v906, %v904
    %v1007 = vpack.c.b16 %v907, %v905
    %v1008 = vpack.c.b16 %v910, %v908
    %v1009 = vpack.c.b16 %v911, %v909
    %v1010 = vpack.c.b16 %v914, %v912
    %v1011 = vpack.c.b16 %v915, %v913
    %v1012 = vpack.c.b16 %v918, %v916
    %v1013 = vpack.c.b16 %v919, %v917
    %v1014 = vpack.c.b16 %v922, %v920
    %v1015 = vpack.c.b16 %v923, %v921
    %v1016 = vpack.c.b16 %v926, %v924
    %v1017 = vpack.c.b16 %v927, %v925
    %v1018 = vpack.c.b16 %v930, %v928
    %v1019 = vpack.c.b16 %v931, %v929
    %v1020 = vpack.c.b16 %v934, %v932
    %v1021 = vpack.c.b16 %v935, %v933
    %v1022 = vpack.c.b16 %v938, %v936
    %v1023 = vpack.c.b16 %v939, %v937
    %v1024 = vpack.c.b16 %v942, %v940
    %v1025 = vpack.c.b16 %v943, %v941
    %v1026 = vpack.c.b16 %v946, %v944
    %v1027 = vpack.c.b16 %v947, %v945
    %v1028 = vpack.c.b16 %v950, %v948
    %v1029 = vpack.c.b16 %v951, %v949
    %v1030 = vpack.c.b16 %v954, %v952
    %v1031 = vpack.c.b16 %v955, %v953
    %v1032 = vpack.c.b16 %v958, %v956
    %v1033 = vpack.c.b16 %v959, %v957
    %v1034 = vpack.c.b16 %v962, %v960
    %v1035 = vpack.c.b16 %v963, %v961
    %v1036 = vpack.c.b16 %v966, %v964
    %v1037 = vpack.c.b16 %v967, %v965
    %v1038 = vpack.c.b16 %v970, %v968
    %v1039 = vpack.c.b16 %v971, %v969
    %v1040 = vpack.c.b16 %v974, %v972
    %v1041 = vpack.c.b16 %v975, %v973
    %v1042 = vpack.c.b16 %v978, %v976
    %v1043 = vpack.c.b16 %v979, %v977
    %1108 = vmatprep.subr.bf16.mxu0 %v995
    %1109 = vmatpush1.bf16.msra.mxu0 %v994
    %1110 = vmatprep.subr.bf16.mxu0 %v993
    %1111 = vmatpush1.bf16.msra.mxu0 %v992
    %1112 = vmatprep.subr.bf16.mxu0 %v991
    %1113 = vmatpush1.bf16.msra.mxu0 %v990
    %1114 = vmatprep.subr.bf16.mxu0 %v989
    %1115 = vmatpush1.bf16.msra.mxu0 %v988
    %1116 = vmatprep.subr.bf16.mxu0 %v987
    %1117 = vmatpush1.bf16.msra.mxu0 %v986
    %1118 = vmatprep.subr.bf16.mxu0 %v985
    %1119 = vmatpush1.bf16.msra.mxu0 %v984
    %1120 = vmatprep.subr.bf16.mxu0 %v983
    %1121 = vmatpush1.bf16.msra.mxu0 %v982
    %1122 = vmatprep.subr.bf16.mxu0 %v981
    %1123 = vmatpush1.bf16.msra.mxu0 %v980
    %1124 = vmatprep.subr.bf16.mxu0 %v1011
    %1125 = vmatpush2.bf16.msra.mxu0 %v1010
    %1126 = vmatprep.subr.bf16.mxu0 %v1009
    %1127 = vmatpush2.bf16.msra.mxu0 %v1008
    %1128 = vmatprep.subr.bf16.mxu0 %v1007
    %1129 = vmatpush2.bf16.msra.mxu0 %v1006
    %1130 = vmatprep.subr.bf16.mxu0 %v1005
    %1131 = vmatpush2.bf16.msra.mxu0 %v1004
    %1132 = vmatprep.subr.bf16.mxu0 %v1003
    %1133 = vmatpush2.bf16.msra.mxu0 %v1002
    %1134 = vmatprep.subr.bf16.mxu0 %v1001
    %1135 = vmatpush2.bf16.msra.mxu0 %v1000
    %1136 = vmatprep.subr.bf16.mxu0 %v999
    %1137 = vmatpush2.bf16.msra.mxu0 %v998
    %1138 = vmatprep.subr.bf16.mxu0 %v997
    %1139 = vmatpush2.bf16.msra.mxu0 %v996
    %1140 = vmatprep.mubr.bf16.mxu0 %v709
    %1141 = vmatmul.mubr.bf16.gmra.mxu0 %v708
    %v1142 = vpop.f32.mrf.mxu0
    %v1143 = vadd.f32 %v781, %v1142
    %v1144 = vpop.f32.mrf.mxu0
    %v1145 = vadd.f32 %v785, %v1144
    %v1146 = vpop.f32.mrf.mxu0
    %v1147 = vpop.f32.mrf.mxu0
    %1148 = vdwg.mxu0
    %1149 = vmatprep.subr.bf16.mxu0 %v1027
    %1150 = vmatpush1.bf16.msra.mxu0 %v1026
    %1151 = vmatprep.subr.bf16.mxu0 %v1025
    %1152 = vmatpush1.bf16.msra.mxu0 %v1024
    %1153 = vmatprep.subr.bf16.mxu0 %v1023
    %1154 = vmatpush1.bf16.msra.mxu0 %v1022
    %1155 = vmatprep.subr.bf16.mxu0 %v1021
    %1156 = vmatpush1.bf16.msra.mxu0 %v1020
    %1157 = vmatprep.subr.bf16.mxu0 %v1019
    %1158 = vmatpush1.bf16.msra.mxu0 %v1018
    %1159 = vmatprep.subr.bf16.mxu0 %v1017
    %1160 = vmatpush1.bf16.msra.mxu0 %v1016
    %1161 = vmatprep.subr.bf16.mxu0 %v1015
    %1162 = vmatpush1.bf16.msra.mxu0 %v1014
    %1163 = vmatprep.subr.bf16.mxu0 %v1013
    %1164 = vmatpush1.bf16.msra.mxu0 %v1012
    %1165 = vmatprep.subr.bf16.mxu0 %v1043
    %1166 = vmatpush2.bf16.msra.mxu0 %v1042
    %1167 = vmatprep.subr.bf16.mxu0 %v1041
    %1168 = vmatpush2.bf16.msra.mxu0 %v1040
    %1169 = vmatprep.subr.bf16.mxu0 %v1039
    %1170 = vmatpush2.bf16.msra.mxu0 %v1038
    %1171 = vmatprep.subr.bf16.mxu0 %v1037
    %1172 = vmatpush2.bf16.msra.mxu0 %v1036
    %1173 = vmatprep.subr.bf16.mxu0 %v1035
    %1174 = vmatpush2.bf16.msra.mxu0 %v1034
    %1175 = vmatprep.subr.bf16.mxu0 %v1033
    %1176 = vmatpush2.bf16.msra.mxu0 %v1032
    %1177 = vmatprep.subr.bf16.mxu0 %v1031
    %1178 = vmatpush2.bf16.msra.mxu0 %v1030
    %1179 = vmatprep.subr.bf16.mxu0 %v1029
    %1180 = vmatpush2.bf16.msra.mxu0 %v1028
    %1181 = vmatprep.mubr.bf16.mxu0 %v711
    %1182 = vmatmul.mubr.bf16.gmra.mxu0 %v710
    %v1183 = vpop.f32.mrf.mxu0
    %v1184 = vadd.f32 %v1143, %v1183
    %v1185 = vpop.f32.mrf.mxu0
    %v1186 = vadd.f32 %v1145, %v1185
    %v1187 = vpop.f32.mrf.mxu0
    %v1188 = vpop.f32.mrf.mxu0
    %1189 = vdwg.mxu0
    %v1190 = vmax.f32 %v1184, 0.0
    %v1191 = vmax.f32 %v1186, 0.0
    %v1192 = vpack.c.bf16 %v1190, %v1190
    %v1193 = vpack.c.bf16 %v1191, %v1191
    %v1194 = vld [vmem:[%s7] sm:$0xf]
    %v1195 = vld [vmem:[%s7 + $0x4] sm:$0xf]
    %v1196 = vld [vmem:[%s7 + $0x8] sm:$0xf]
    %v1197 = vld [vmem:[%s7 + $0xc] sm:$0xf]
    %v1198 = vld [vmem:[%s7 + $0x10] sm:$0xf]
    %v1199 = vld [vmem:[%s7 + $0x14] sm:$0xf]
    %v1200 = vld [vmem:[%s7 + $0x18] sm:$0xf]
    %v1201 = vld [vmem:[%s7 + $0x1c] sm:$0xf]
    %v1202 = vld [vmem:[%s7 + $0x20] sm:$0xf]
    %v1203 = vld [vmem:[%s7 + $0x24] sm:$0xf]
    %v1204 = vld [vmem:[%s7 + $0x28] sm:$0xf]
    %v1205 = vld [vmem:[%s7 + $0x2c] sm:$0xf]
    %v1206 = vld [vmem:[%s7 + $0x30] sm:$0xf]
    %v1207 = vld [vmem:[%s7 + $0x34] sm:$0xf]
    %v1208 = vld [vmem:[%s7 + $0x38] sm:$0xf]
    %v1209 = vld [vmem:[%s7 + $0x3c] sm:$0xf]
    %v1210 = vld [vmem:[%s7 + $0x40] sm:$0xf]
    %v1211 = vld [vmem:[%s7 + $0x44] sm:$0xf]
    %v1212 = vld [vmem:[%s7 + $0x48] sm:$0xf]
    %v1213 = vld [vmem:[%s7 + $0x4c] sm:$0xf]
    %v1214 = vld [vmem:[%s7 + $0x50] sm:$0xf]
    %v1215 = vld [vmem:[%s7 + $0x54] sm:$0xf]
    %v1216 = vld [vmem:[%s7 + $0x58] sm:$0xf]
    %v1217 = vld [vmem:[%s7 + $0x5c] sm:$0xf]
    %v1218 = vld [vmem:[%s7 + $0x60] sm:$0xf]
    %v1219 = vld [vmem:[%s7 + $0x64] sm:$0xf]
    %v1220 = vld [vmem:[%s7 + $0x68] sm:$0xf]
    %v1221 = vld [vmem:[%s7 + $0x6c] sm:$0xf]
    %v1222 = vld [vmem:[%s7 + $0x70] sm:$0xf]
    %v1223 = vld [vmem:[%s7 + $0x74] sm:$0xf]
    %v1224 = vld [vmem:[%s7 + $0x78] sm:$0xf]
    %v1225 = vld [vmem:[%s7 + $0x7c] sm:$0xf]
    %v1226 = vld [vmem:[%s8] sm:$0x1]
    %v1228 = vlaneseq
    %v1229 = vshrl.u32 %v1228, 7
    %v1230 = vsub.s32 0, %v1229
    %v1231 = vrot.slane %v1226, %v1230
    %v1265 = vunpack.c.l.b16 %v1194
    %v1266 = vunpack.c.l.b16 %v1195
    %v1267 = vunpack.c.l.b16 %v1196
    %v1268 = vunpack.c.l.b16 %v1197
    %v1269 = vunpack.c.l.b16 %v1198
    %v1270 = vunpack.c.l.b16 %v1199
    %v1271 = vunpack.c.l.b16 %v1200
    %v1272 = vunpack.c.l.b16 %v1201
    %v1273 = vunpack.c.l.b16 %v1202
    %v1274 = vunpack.c.l.b16 %v1203
    %v1275 = vunpack.c.l.b16 %v1204
    %v1276 = vunpack.c.l.b16 %v1205
    %v1277 = vunpack.c.l.b16 %v1206
    %v1278 = vunpack.c.l.b16 %v1207
    %v1279 = vunpack.c.l.b16 %v1208
    %v1280 = vunpack.c.l.b16 %v1209
    %v1281 = vunpack.c.l.b16 %v1210
    %v1282 = vunpack.c.l.b16 %v1211
    %v1283 = vunpack.c.l.b16 %v1212
    %v1284 = vunpack.c.l.b16 %v1213
    %v1285 = vunpack.c.l.b16 %v1214
    %v1286 = vunpack.c.l.b16 %v1215
    %v1287 = vunpack.c.l.b16 %v1216
    %v1288 = vunpack.c.l.b16 %v1217
    %v1289 = vunpack.c.l.b16 %v1218
    %v1290 = vunpack.c.l.b16 %v1219
    %v1291 = vunpack.c.l.b16 %v1220
    %v1292 = vunpack.c.l.b16 %v1221
    %v1293 = vunpack.c.l.b16 %v1222
    %v1294 = vunpack.c.l.b16 %v1223
    %v1295 = vunpack.c.l.b16 %v1224
    %v1296 = vunpack.c.l.b16 %v1225
    %v1297 = vpack.c.b16 %v1266, %v1265
    %v1298 = vpack.c.b16 %v1268, %v1267
    %v1299 = vpack.c.b16 %v1270, %v1269
    %v1300 = vpack.c.b16 %v1272, %v1271
    %v1301 = vpack.c.b16 %v1274, %v1273
    %v1302 = vpack.c.b16 %v1276, %v1275
    %v1303 = vpack.c.b16 %v1278, %v1277
    %v1304 = vpack.c.b16 %v1280, %v1279
    %v1305 = vpack.c.b16 %v1282, %v1281
    %v1306 = vpack.c.b16 %v1284, %v1283
    %v1307 = vpack.c.b16 %v1286, %v1285
    %v1308 = vpack.c.b16 %v1288, %v1287
    %v1309 = vpack.c.b16 %v1290, %v1289
    %v1310 = vpack.c.b16 %v1292, %v1291
    %v1311 = vpack.c.b16 %v1294, %v1293
    %v1312 = vpack.c.b16 %v1296, %v1295
    %1329 = vmatprep.subr.bf16.mxu0 0
    %1330 = vmatpush1.bf16.msra.mxu0 %v1304
    %1331 = vmatprep.subr.bf16.mxu0 0
    %1332 = vmatpush1.bf16.msra.mxu0 %v1303
    %1333 = vmatprep.subr.bf16.mxu0 0
    %1334 = vmatpush1.bf16.msra.mxu0 %v1302
    %1335 = vmatprep.subr.bf16.mxu0 0
    %1336 = vmatpush1.bf16.msra.mxu0 %v1301
    %1337 = vmatprep.subr.bf16.mxu0 0
    %1338 = vmatpush1.bf16.msra.mxu0 %v1300
    %1339 = vmatprep.subr.bf16.mxu0 0
    %1340 = vmatpush1.bf16.msra.mxu0 %v1299
    %1341 = vmatprep.subr.bf16.mxu0 0
    %1342 = vmatpush1.bf16.msra.mxu0 %v1298
    %1343 = vmatprep.subr.bf16.mxu0 0
    %1344 = vmatpush1.bf16.msra.mxu0 %v1297
    %1345 = vmatprep.subr.bf16.mxu0 0
    %1346 = vmatpush2.bf16.msra.mxu0 %v1312
    %1347 = vmatprep.subr.bf16.mxu0 0
    %1348 = vmatpush2.bf16.msra.mxu0 %v1311
    %1349 = vmatprep.subr.bf16.mxu0 0
    %1350 = vmatpush2.bf16.msra.mxu0 %v1310
    %1351 = vmatprep.subr.bf16.mxu0 0
    %1352 = vmatpush2.bf16.msra.mxu0 %v1309
    %1353 = vmatprep.subr.bf16.mxu0 0
    %1354 = vmatpush2.bf16.msra.mxu0 %v1308
    %1355 = vmatprep.subr.bf16.mxu0 0
    %1356 = vmatpush2.bf16.msra.mxu0 %v1307
    %1357 = vmatprep.subr.bf16.mxu0 0
    %1358 = vmatpush2.bf16.msra.mxu0 %v1306
    %1359 = vmatprep.subr.bf16.mxu0 0
    %1360 = vmatpush2.bf16.msra.mxu0 %v1305
    %1361 = vmatprep.mubr.bf16.mxu0 %v1193
    %1362 = vmatmul.mubr.bf16.gmra.mxu0 %v1192
    %v1363 = vpop.f32.mrf.mxu0
    %v1364 = vadd.f32 %v1231, %v1363
    %v1365 = vpop.f32.mrf.mxu0
    %v1366 = vpop.f32.mrf.mxu0
    %v1367 = vpop.f32.mrf.mxu0
    %1368 = vdwg.mxu0
    %vm1369 = vcmask 130048
    %1370 = vst.msk [vmem:[#allocation7] sm:$0xff] %vm1369, %v1364
    // Predicated region
    $region46: #{tpu_custom_call.1} parent=1 // pred_check
      _
    $region47: #{tpu_custom_call.1} parent=1 // pred_check_branch
      %1372 = sbr.rel (0) target = $region49
    $region48: #{tpu_custom_call.1} parent=1 // pred_region
      %s1374 = ssub.s32 128, 128
      %1375 = vsyncadd [#allocation4], %s1374
      %s1377 = sshll.u32 [#allocation7], 4
      %s1378 = int_to_ptr.vmem [resolvable:$true] %s1377
      %1380 = dma.vmem_to_hbm [thread:$0]  %s1378, 128, %s9, [#allocation4]
    $region49: #{tpu_custom_call.1} parent=1 // pred_fallthru
      _
    // Predicated region
    $region50: #{tpu_custom_call.1} parent=1 // pred_check
      _
    $region51: #{tpu_custom_call.1} parent=1 // pred_check_branch
      %1382 = sbr.rel (0) target = $region53
    $region52: #{tpu_custom_call.1} parent=1 // pred_region
      %1383 = dma.done [#allocation4], 128
    $region53: #{tpu_custom_call.1} parent=1 // pred_fallthru
      _
    %1384 = vsyncpa [#allocation3], 1
    %1385 = vsyncpa [#allocation6], 1
    %1386 = vsyncpa [#allocation4], 1

</llo_original>
